<compile_context>
chip_gen: v7x
topology: tpu7x:2x2x1
jax: 0.10.0
libtpu: 0.0.40
codegen_flags: <defaults>
</compile_context>

<pallas_src>
import math

import jax
import jax.numpy as jnp
import numpy as np
from jax.experimental import pallas as pl
from jax.experimental.pallas import tpu as pltpu


# ------------------------------- Pallas kernel -------------------------------

def _maxout_kernel(x_ref, w_ref, b_ref, o_ref, acc_ref, mx_ref):
    """Grid = (M tiles, N tiles, pool, K tiles).

    acc_ref : f32 (tm, tn) matmul accumulator over the K axis.
    mx_ref  : f32 (tm, tn) running max over the pool axis.
    """
    j = pl.program_id(2)                  # pool index
    k = pl.program_id(3)                  # K (reduction) tile index
    last_j = pl.num_programs(2) - 1
    last_k = pl.num_programs(3) - 1

    @pl.when((j == 0) & (k == 0))
    def _init_running_max():
        mx_ref[...] = jnp.full_like(mx_ref, -jnp.inf)

    @pl.when(k == 0)
    def _init_acc():
        acc_ref[...] = jnp.zeros_like(acc_ref)

    # (tm, tk) @ (tk, tn) on the MXU, f32 accumulation.
    acc_ref[...] += jnp.dot(x_ref[...], w_ref[0],
                            preferred_element_type=jnp.float32)

    @pl.when(k == last_k)
    def _pool_max():
        mx_ref[...] = jnp.maximum(mx_ref[...], acc_ref[...] + b_ref[0])

    @pl.when((j == last_j) & (k == last_k))
    def _write():
        o_ref[...] = mx_ref[...].astype(o_ref.dtype)


def _pick_tile(dim, preferred, align):
    if dim <= preferred:
        return dim                         # full extent is always a legal block dim
    return max(align, (preferred // align) * align)


def maxout(x, weight, bias, dim_out, pool, *, compute_dtype=None,
           tile_m=512, tile_n=512, tile_k=512):
    """y[..., i] = max_j ( x @ weight[i*pool + j, :].T + bias[i*pool + j] ).

    Matches PyTorch:  Linear(d_in, d_out*pool)(x).view(..., d_out, pool).max(-1).
    weight: (d_out*pool, d_in) [PyTorch Linear layout], bias: (d_out*pool,).
    compute_dtype=jnp.bfloat16 casts the matmul operands only (f32 accumulation)
    for v6e/v7x MXU throughput; default keeps everything f32.
    """
    *lead, d_in = x.shape
    assert weight.shape == (dim_out * pool, d_in)
    assert bias.shape == (dim_out * pool,)
    M = math.prod(lead) if lead else 1
    N, K = dim_out, d_in
    out_dtype = x.dtype

    # PyTorch's view(..., d_out, pool) means column c = i*pool + j (out-major,
    # pool-minor).  Build per-pool weight slabs: w_pools[j, k, i] = weight[i*pool+j, k].
    w_pools = weight.reshape(dim_out, pool, d_in).transpose(1, 2, 0)   # (pool, K, N)
    b_pools = bias.reshape(dim_out, pool).T.reshape(pool, 1, dim_out).astype(jnp.float32)

    x2 = x.reshape(M, K)
    if compute_dtype is not None:
        x2 = x2.astype(compute_dtype)
        w_pools = w_pools.astype(compute_dtype)

    tm = _pick_tile(M, tile_m, 8)          # sublane-aligned (or full)
    tn = _pick_tile(N, tile_n, 128)        # lane-aligned (or full)
    tk = _pick_tile(K, tile_k, 128)

    # Reduction axis must divide exactly; zero-padding K is mathematically exact.
    if tk < K and K % tk:
        pad = tk - (K % tk)
        x2 = jnp.pad(x2, ((0, 0), (0, pad)))
        w_pools = jnp.pad(w_pools, ((0, 0), (0, pad), (0, 0)))
        K += pad

    grid = (pl.cdiv(M, tm), pl.cdiv(N, tn), pool, pl.cdiv(K, tk))

    out = pl.pallas_call(
        _maxout_kernel,
        grid_spec=pltpu.PrefetchScalarGridSpec(
            num_scalar_prefetch=0,
            grid=grid,
            in_specs=[
                pl.BlockSpec((tm, tk), lambda mi, ni, j, k: (mi, k)),
                pl.BlockSpec((1, tk, tn), lambda mi, ni, j, k: (j, k, ni)),
                pl.BlockSpec((1, 1, tn), lambda mi, ni, j, k: (j, 0, ni)),
            ],
            out_specs=pl.BlockSpec((tm, tn), lambda mi, ni, j, k: (mi, ni)),
            scratch_shapes=[pltpu.VMEM((tm, tn), jnp.float32),   # acc
                            pltpu.VMEM((tm, tn), jnp.float32)],  # running max
        ),
        out_shape=jax.ShapeDtypeStruct((M, N), out_dtype),
        compiler_params=pltpu.CompilerParams(
            dimension_semantics=("parallel", "parallel", "arbitrary", "arbitrary")),
    )(x2, w_pools, b_pools)

    return out.reshape(*lead, N)


# ------------------------------ pure-JAX reference ----------------------------

def maxout_ref(x, weight, bias, dim_out, pool):
    y = x @ weight.T + bias
    y = y.reshape(x.shape[:-1] + (dim_out, pool))
    return jnp.max(y, axis=-1)


# ------------------------------------ main ------------------------------------

if __name__ == "__main__":
    key = jax.random.PRNGKey(0)

    # Demo 1: DCN-style Maxout head (dim_in = 3d, dim_out = d, pool = 16), f32.
    B, S, d = 2, 10, 16
    d_in, d_out, pool = 3 * d, d, 16
    k1, k2, k3, key = jax.random.split(key, 4)
    x = jax.random.normal(k1, (B, S, d_in), jnp.float32)
    w = jax.random.normal(k2, (d_out * pool, d_in), jnp.float32) * 0.15
    b = jax.random.normal(k3, (d_out * pool,), jnp.float32) * 0.1

    run_f32 = jax.jit(lambda xx, ww, bb: maxout(xx, ww, bb, d_out, pool))
    out = jax.block_until_ready(run_f32(x, w, b))
    ref = maxout_ref(x, w, b, d_out, pool)
    np.testing.assert_allclose(np.asarray(out), np.asarray(ref), rtol=2e-2, atol=2e-2)

    # Demo 2: lane-dense output (d_out = 128), bf16 operands / f32 accumulation.
    B2, S2, d_in2, d_out2, pool2 = 2, 64, 64, 128, 4
    k1, k2, k3, key = jax.random.split(key, 4)
    x2 = jax.random.normal(k1, (B2, S2, d_in2), jnp.float32)
    w2 = jax.random.normal(k2, (d_out2 * pool2, d_in2), jnp.float32) * 0.15
    b2 = jax.random.normal(k3, (d_out2 * pool2,), jnp.float32) * 0.1

    run_bf16 = jax.jit(lambda xx, ww, bb: maxout(
        xx, ww, bb, d_out2, pool2, compute_dtype=jnp.bfloat16))
    out2 = jax.block_until_ready(run_bf16(x2, w2, b2))
    ref2 = maxout_ref(x2, w2, b2, d_out2, pool2)
    np.testing.assert_allclose(np.asarray(out2), np.asarray(ref2), rtol=5e-2, atol=5e-2)

    print("KERNEL_OK")
</pallas_src>

<mosaic_0001>
module attributes {stable_mosaic.version = 11 : i64} {
  func.func @_maxout_kernel(%arg0: i32, %arg1: i32, %arg2: i32, %arg3: i32, %arg4: memref<20x48xf32, #tpu.memory_space<vmem>>, %arg5: memref<1x48x16xf32, #tpu.memory_space<vmem>>, %arg6: memref<1x1x16xf32, #tpu.memory_space<vmem>>, %arg7: memref<20x16xf32, #tpu.memory_space<vmem>>, %arg8: memref<20x16xf32, #tpu.memory_space<vmem>>, %arg9: memref<20x16xf32, #tpu.memory_space<vmem>>) attributes {dimension_semantics = [#tpu.dimension_semantics<parallel>, #tpu.dimension_semantics<parallel>, #tpu.dimension_semantics<arbitrary>, #tpu.dimension_semantics<arbitrary>], iteration_bounds = array<i64: 1, 1, 16, 1>, scalar_prefetch = 0 : i64, scratch_operands = 2 : i64, tpu.core_type = #tpu.core_type<tc>, window_params = [{transform_indices = @transform_0, window_bounds = array<i64: 20, 48>}, {transform_indices = @transform_1, window_bounds = array<i64: 1, 48, 16>}, {transform_indices = @transform_2, window_bounds = array<i64: 1, 1, 16>}, {transform_indices = @transform_3, window_bounds = array<i64: 20, 16>}]} {
    %c0_i32 = arith.constant 0 : i32
    %0 = arith.cmpi eq, %arg2, %c0_i32 : i32
    %c0_i32_0 = arith.constant 0 : i32
    %1 = arith.cmpi eq, %arg3, %c0_i32_0 : i32
    %2 = arith.andi %0, %1 : i1
    %3 = arith.extui %2 : i1 to i32
    %c0_i32_1 = arith.constant 0 : i32
    %4 = arith.cmpi ne, %3, %c0_i32_1 : i32
    scf.if %4 {
      %cst_16 = arith.constant 0xFF800000 : f32
      %23 = vector.broadcast %cst_16 : f32 to vector<20x16xf32>
      %c0_17 = arith.constant 0 : index
      %c0_18 = arith.constant 0 : index
      %24 = vector.load %arg9[%c0_17, %c0_18] : memref<20x16xf32, #tpu.memory_space<vmem>>, vector<20x16xf32>
      tpu.vector_store %arg9[%c0_17, %c0_18], %23 {strides = array<i32>} : memref<20x16xf32, #tpu.memory_space<vmem>>, vector<20x16xf32>,
    } else {
    }
    %c0_i32_2 = arith.constant 0 : i32
    %5 = arith.cmpi eq, %arg3, %c0_i32_2 : i32
    %6 = arith.extui %5 : i1 to i32
    %c0_i32_3 = arith.constant 0 : i32
    %7 = arith.cmpi ne, %6, %c0_i32_3 : i32
    scf.if %7 {
      %cst_16 = arith.constant 0.000000e+00 : f32
      %23 = vector.broadcast %cst_16 : f32 to vector<20x16xf32>
      %c0_17 = arith.constant 0 : index
      %c0_18 = arith.constant 0 : index
      %24 = vector.load %arg8[%c0_17, %c0_18] : memref<20x16xf32, #tpu.memory_space<vmem>>, vector<20x16xf32>
      tpu.vector_store %arg8[%c0_17, %c0_18], %23 {strides = array<i32>} : memref<20x16xf32, #tpu.memory_space<vmem>>, vector<20x16xf32>,
    } else {
    }
    %c0 = arith.constant 0 : index
    %c0_4 = arith.constant 0 : index
    %8 = vector.load %arg8[%c0, %c0_4] : memref<20x16xf32, #tpu.memory_space<vmem>>, vector<20x16xf32>
    %c0_5 = arith.constant 0 : index
    %c0_6 = arith.constant 0 : index
    %9 = vector.load %arg4[%c0_5, %c0_6] : memref<20x48xf32, #tpu.memory_space<vmem>>, vector<20x48xf32>
    %c0_7 = arith.constant 0 : index
    %c0_8 = arith.constant 0 : index
    %c0_9 = arith.constant 0 : index
    %10 = vector.load %arg5[%c0_7, %c0_8, %c0_9] : memref<1x48x16xf32, #tpu.memory_space<vmem>>, vector<1x48x16xf32>
    %11 = vector.shape_cast %10 : vector<1x48x16xf32> to vector<48x16xf32>
    %cst = arith.constant dense<0.000000e+00> : vector<20x16xf32>
    %12 = tpu.matmul %9, %11, %cst {dimension_numbers = #tpu.dot_dimension_numbers<[1], [0], [0], [1], [0, 0, 1, 1], [], []>} : vector<20x48xf32>, vector<48x16xf32>, vector<20x16xf32> -> vector<20x16xf32>
    %13 = arith.addf %8, %12 : vector<20x16xf32>
    %c0_10 = arith.constant 0 : index
    %c0_11 = arith.constant 0 : index
    %14 = vector.load %arg8[%c0_10, %c0_11] : memref<20x16xf32, #tpu.memory_space<vmem>>, vector<20x16xf32>
    tpu.vector_store %arg8[%c0_10, %c0_11], %13 {strides = array<i32>} : memref<20x16xf32, #tpu.memory_space<vmem>>, vector<20x16xf32>,
    %c0_i32_12 = arith.constant 0 : i32
    %15 = arith.cmpi eq, %arg3, %c0_i32_12 : i32
    %16 = arith.extui %15 : i1 to i32
    %c0_i32_13 = arith.constant 0 : i32
    %17 = arith.cmpi ne, %16, %c0_i32_13 : i32
    scf.if %17 {
      %c0_16 = arith.constant 0 : index
      %c0_17 = arith.constant 0 : index
      %23 = vector.load %arg9[%c0_16, %c0_17] : memref<20x16xf32, #tpu.memory_space<vmem>>, vector<20x16xf32>
      %c0_18 = arith.constant 0 : index
      %c0_19 = arith.constant 0 : index
      %24 = vector.load %arg8[%c0_18, %c0_19] : memref<20x16xf32, #tpu.memory_space<vmem>>, vector<20x16xf32>
      %c0_20 = arith.constant 0 : index
      %c0_21 = arith.constant 0 : index
      %c0_22 = arith.constant 0 : index
      %25 = vector.load %arg6[%c0_20, %c0_21, %c0_22] : memref<1x1x16xf32, #tpu.memory_space<vmem>>, vector<1x1x16xf32>
      %26 = vector.shape_cast %25 : vector<1x1x16xf32> to vector<1x16xf32>
      %27 = vector.broadcast %26 : vector<1x16xf32> to vector<20x16xf32>
      %28 = arith.addf %24, %27 : vector<20x16xf32>
      %29 = arith.maximumf %23, %28 : vector<20x16xf32>
      %c0_23 = arith.constant 0 : index
      %c0_24 = arith.constant 0 : index
      %30 = vector.load %arg9[%c0_23, %c0_24] : memref<20x16xf32, #tpu.memory_space<vmem>>, vector<20x16xf32>
      tpu.vector_store %arg9[%c0_23, %c0_24], %29 {strides = array<i32>} : memref<20x16xf32, #tpu.memory_space<vmem>>, vector<20x16xf32>,
    } else {
    }
    %c15_i32 = arith.constant 15 : i32
    %18 = arith.cmpi eq, %arg2, %c15_i32 : i32
    %c0_i32_14 = arith.constant 0 : i32
    %19 = arith.cmpi eq, %arg3, %c0_i32_14 : i32
    %20 = arith.andi %18, %19 : i1
    %21 = arith.extui %20 : i1 to i32
    %c0_i32_15 = arith.constant 0 : i32
    %22 = arith.cmpi ne, %21, %c0_i32_15 : i32
    scf.if %22 {
      %c0_16 = arith.constant 0 : index
      %c0_17 = arith.constant 0 : index
      %23 = vector.load %arg9[%c0_16, %c0_17] : memref<20x16xf32, #tpu.memory_space<vmem>>, vector<20x16xf32>
      %c0_18 = arith.constant 0 : index
      %c0_19 = arith.constant 0 : index
      %24 = vector.load %arg7[%c0_18, %c0_19] : memref<20x16xf32, #tpu.memory_space<vmem>>, vector<20x16xf32>
      tpu.vector_store %arg7[%c0_18, %c0_19], %23 {strides = array<i32>} : memref<20x16xf32, #tpu.memory_space<vmem>>, vector<20x16xf32>,
    } else {
    }
    return
  }
  func.func @transform_0(%arg0: i32, %arg1: i32, %arg2: i32, %arg3: i32) -> (i32, i32) {
    %c0_i32 = arith.constant 0 : i32
    return %arg0, %arg3 : i32, i32
  }
  func.func @transform_1(%arg0: i32, %arg1: i32, %arg2: i32, %arg3: i32) -> (i32, i32, i32) {
    %c0_i32 = arith.constant 0 : i32
    return %arg2, %arg3, %arg1 : i32, i32, i32
  }
  func.func @transform_2(%arg0: i32, %arg1: i32, %arg2: i32, %arg3: i32) -> (i32, i32, i32) {
    %c0_i32 = arith.constant 0 : i32
    %c0_i32_0 = arith.constant 0 : i32
    return %arg2, %c0_i32, %arg1 : i32, i32, i32
  }
  func.func @transform_3(%arg0: i32, %arg1: i32, %arg2: i32, %arg3: i32) -> (i32, i32) {
    %c0_i32 = arith.constant 0 : i32
    return %arg0, %arg1 : i32, i32
  }
}

</mosaic_0001>

<llo_original>
// kernel: _lambda_.1
$region0: #{_lambda_.1}
  #allocation0 [shape = 'u32[]', space=smem, size = 0x4, offset = 0x4, fixed_abs, tag = 'smem constant byte address 0x4 - core index']
  #allocation1 [shape = 'u32[144,128]{1,0:T(1,128)}', space=vmem, size = 0x12000, scoped, tag = 'internal scratch']
  #allocation2 [shape = 'f32[20,16]{1,0:T(8,128)}', space=vmem, size = 0x3000, scoped, tag = 'scratch operand']
  #allocation3 [shape = 'f32[20,16]{1,0:T(8,128)}', space=vmem, size = 0x3000, scoped, tag = 'scratch operand']
  %s0 = inlined_call_operand.vmem [shape: f32[20,48], index: 0, kind: input, shape index: {}]
  %s1 = inlined_call_operand.vmem [shape: f32[16,48,16], index: 1, kind: input, shape index: {}]
  %s2 = inlined_call_operand.vmem [shape: f32[16,1,16], index: 2, kind: input, shape index: {}]
  %s3 = inlined_call_operand.vmem [shape: f32[20,16], index: 3, kind: output, shape index: {}]
  %s4 = sld [smem:[#allocation0]]
  $region61: #{_lambda_.1} parent=0
    _
  %s6 = ssub.s32 1, %s4
  %s7 = scalar_select 0, %s6, %s4
  loop: start=0, step=1, limit=18
  $region2: #{_lambda_.1} parent=0 // loop_pre_header
    _
  $region3: #{_lambda_.1} parent=0 // loop_header
    %s9 = sphi 0, %s13
    %p10 = scmp.ge.s32.totalorder %s9, 18
    %s16 = sphi 0, %s42
    %s17 = sphi 0, %s38
    %s18 = sphi 0, %s34
    %s19 = sphi 0, %s30
    %s20 = sphi 0, %s16
    %s21 = sphi 0, %s17
    %s22 = sphi 0, %s18
    %s23 = sphi 0, %s19
    %s24 = sphi 0, %s20
    %s25 = sphi 0, %s21
    %s26 = sphi 0, %s22
    %s27 = sphi 0, %s23
    %s47 = sphi 0, %s49
    %s50 = sphi 0, %s47
    %s51 = sphi 0, %s50
    %s67 = sphi 0, %s51
    %s77 = sphi 0, %s79
    %s80 = sphi 0, %s77
    %s81 = sphi 0, %s80
    %s97 = sphi 0, %s81
    %s105 = sphi 0, %s107
    %s108 = sphi 0, %s105
    %s109 = sphi 0, %s108
    %s125 = sphi 0, %s109
    %s133 = sphi 0, %s135
    %s136 = sphi 0, %s133
    %s137 = sphi 0, %s136
    %s153 = sphi 0, %s137
  $region4: #{_lambda_.1} parent=0 // loop_header_branch
    %12 = sbr.rel (%p10) target = $region8
  $region5: #{_lambda_.1} parent=0 // loop_body
    %s14 = ssub.s32 %s9, 1
    %s15 = ssub.s32 %s9, 2
    %s28 = sadd.s32 1, %s19
    %p29 = scmp.ge.s32.totalorder %s28, 1
    %s30 = scalar_select %p29, 0, %s28
    %s31 = sadd.s32 1, %s18
    %s32 = scalar_select %p29, %s31, %s18
    %p33 = scmp.ge.s32.totalorder %s32, 16
    %s34 = scalar_select %p33, 0, %s32
    %s35 = sadd.s32 1, %s17
    %s36 = scalar_select %p33, %s35, %s17
    %p37 = scmp.ge.s32.totalorder %s36, 1
    %s38 = scalar_select %p37, 0, %s36
    %s39 = sadd.s32 1, %s16
    %s40 = scalar_select %p37, %s39, %s16
    %p41 = scmp.ge.s32.totalorder %s40, 1
    %s42 = scalar_select %p41, 0, %s40
    %s43 = ssub.s32 %s16, %s42
    %s44 = ssub.s32 %s19, %s30
    %s45 = sor.u32 %s43, %s44
    %p46 = scmp.eq.s32.totalorder %s45, 0
    %s48 = sadd.s32 %s47, 1
    %s49 = scalar_select %p46, %s47, %s48
    %p52 = pneg %p46
    %p53 = scmp.eq.s32.totalorder %s9, 15
    %p54 = por %p52, %p53
    %p55 = scmp.ne.s32.totalorder %s47, %s50
    %p56 = scmp.eq.s32.totalorder %s9, 0
    %p57 = por %p55, %p56
    %p58 = scmp.ne.s32.totalorder %s47, %s50
    %p59 = scmp.eq.s32.totalorder %s14, 15
    %p60 = por %p58, %p59
    %p61 = scmp.ne.s32.totalorder %s50, %s51
    %p62 = scmp.eq.s32.totalorder %s14, 0
    %p63 = por %p61, %p62
    %p64 = scmp.ne.s32.totalorder %s50, %s51
    %p65 = scmp.eq.s32.totalorder %s15, 15
    %p66 = por %p64, %p65
    %p68 = scmp.ne.s32.totalorder %s51, %s67
    %p69 = scmp.eq.s32.totalorder %s15, 0
    %p70 = por %p68, %p69
    %s71 = ssub.s32 %s18, %s34
    %s72 = ssub.s32 %s19, %s30
    %s73 = sor.u32 %s71, %s72
    %s74 = ssub.s32 %s17, %s38
    %s75 = sor.u32 %s73, %s74
    %p76 = scmp.eq.s32.totalorder %s75, 0
    %s78 = sadd.s32 %s77, 1
    %s79 = scalar_select %p76, %s77, %s78
    %p82 = pneg %p76
    %p83 = scmp.eq.s32.totalorder %s9, 15
    %p84 = por %p82, %p83
    %p85 = scmp.ne.s32.totalorder %s77, %s80
    %p86 = scmp.eq.s32.totalorder %s9, 0
    %p87 = por %p85, %p86
    %p88 = scmp.ne.s32.totalorder %s77, %s80
    %p89 = scmp.eq.s32.totalorder %s14, 15
    %p90 = por %p88, %p89
    %p91 = scmp.ne.s32.totalorder %s80, %s81
    %p92 = scmp.eq.s32.totalorder %s14, 0
    %p93 = por %p91, %p92
    %p94 = scmp.ne.s32.totalorder %s80, %s81
    %p95 = scmp.eq.s32.totalorder %s15, 15
    %p96 = por %p94, %p95
    %p98 = scmp.ne.s32.totalorder %s81, %s97
    %p99 = scmp.eq.s32.totalorder %s15, 0
    %p100 = por %p98, %p99
    %s101 = ssub.s32 %s18, %s34
    %s102 = ssub.s32 %s17, %s38
    %s103 = sor.u32 %s101, %s102
    %p104 = scmp.eq.s32.totalorder %s103, 0
    %s106 = sadd.s32 %s105, 1
    %s107 = scalar_select %p104, %s105, %s106
    %p110 = pneg %p104
    %p111 = scmp.eq.s32.totalorder %s9, 15
    %p112 = por %p110, %p111
    %p113 = scmp.ne.s32.totalorder %s105, %s108
    %p114 = scmp.eq.s32.totalorder %s9, 0
    %p115 = por %p113, %p114
    %p116 = scmp.ne.s32.totalorder %s105, %s108
    %p117 = scmp.eq.s32.totalorder %s14, 15
    %p118 = por %p116, %p117
    %p119 = scmp.ne.s32.totalorder %s108, %s109
    %p120 = scmp.eq.s32.totalorder %s14, 0
    %p121 = por %p119, %p120
    %p122 = scmp.ne.s32.totalorder %s108, %s109
    %p123 = scmp.eq.s32.totalorder %s15, 15
    %p124 = por %p122, %p123
    %p126 = scmp.ne.s32.totalorder %s109, %s125
    %p127 = scmp.eq.s32.totalorder %s15, 0
    %p128 = por %p126, %p127
    %s129 = ssub.s32 %s16, %s42
    %s130 = ssub.s32 %s17, %s38
    %s131 = sor.u32 %s129, %s130
    %p132 = scmp.eq.s32.totalorder %s131, 0
    %s134 = sadd.s32 %s133, 1
    %s135 = scalar_select %p132, %s133, %s134
    %p138 = pneg %p132
    %p139 = scmp.eq.s32.totalorder %s9, 15
    %p140 = por %p138, %p139
    %p141 = scmp.ne.s32.totalorder %s133, %s136
    %p142 = scmp.eq.s32.totalorder %s9, 0
    %p143 = por %p141, %p142
    %p144 = scmp.ne.s32.totalorder %s133, %s136
    %p145 = scmp.eq.s32.totalorder %s14, 15
    %p146 = por %p144, %p145
    %p147 = scmp.ne.s32.totalorder %s136, %s137
    %p148 = scmp.eq.s32.totalorder %s14, 0
    %p149 = por %p147, %p148
    %p150 = scmp.ne.s32.totalorder %s136, %s137
    %p151 = scmp.eq.s32.totalorder %s15, 15
    %p152 = por %p150, %p151
    %p154 = scmp.ne.s32.totalorder %s137, %s153
    %p155 = scmp.eq.s32.totalorder %s15, 0
    %p156 = por %p154, %p155
    %p157 = scmp.le.s32.totalorder 1, %s9
    %p158 = scmp.lt.s32.totalorder %s9, 17
    %p159 = pnand %p157, %p158
    %p160 = pneg %p159
    // Predicated region
    $region9: #{_lambda_.1} parent=5 // pred_check
      _
    $region10: #{_lambda_.1} parent=5 // pred_check_branch
      %162 = sbr.rel (%p159) target = $region12
    $region11: #{_lambda_.1} parent=5 // pred_region
      %s163 = ssub.s32 %s9, 1
      // Predicated region
      $region13: #{_lambda_.1} parent=11 // pred_check
        %p164 = pneg %p63
      $region14: #{_lambda_.1} parent=11 // pred_check_branch
        %166 = sbr.rel (%p164) target = $region16
      $region15: #{_lambda_.1} parent=11 // pred_region
        %s167 = smul.u32 3, %s20
        %p168 = scmp.lt.s32.totalorder %s167, 2
        %s169 = scalar_select %p168, %s167, 2
        %p170 = scmp.lt.s32.totalorder %s23, 0
        %s171 = scalar_select %p170, %s23, 0
        %s172 = sadd.s32 %s171, %s169
        %s173 = smul.addr %s172, 8
        %s174 = scalar_lea.vmem %s0, %s173
        %s175 = smul.u32 3, %s20
      $region16: #{_lambda_.1} parent=11 // pred_fallthru
        _
    $region12: #{_lambda_.1} parent=5 // pred_fallthru
      _
    %p176 = scmp.lt.s32.totalorder %s9, 16
    // Predicated region
    $region17: #{_lambda_.1} parent=5 // pred_check
      %p177 = pneg %p176
    $region18: #{_lambda_.1} parent=5 // pred_check_branch
      %179 = sbr.rel (%p177) target = $region20
    $region19: #{_lambda_.1} parent=5 // pred_region
      // Predicated region
      $region21: #{_lambda_.1} parent=19 // pred_check
        %p180 = pneg %p87
      $region22: #{_lambda_.1} parent=19 // pred_check_branch
        %182 = sbr.rel (%p180) target = $region24
      $region23: #{_lambda_.1} parent=19 // pred_region
        %s183 = smul.u32 6, %s19
        %p184 = scmp.lt.s32.totalorder %s18, 15
        %s185 = scalar_select %p184, %s18, 15
        %p186 = scmp.lt.s32.totalorder %s183, 5
        %s187 = scalar_select %p186, %s183, 5
        %p188 = scmp.lt.s32.totalorder %s17, 0
        %s189 = scalar_select %p188, %s17, 0
        %s190 = sadd.s32 %s189, %s187
        %s191 = smul.addr %s185, 6
        %s192 = sadd.s32 %s190, %s191
        %s193 = smul.addr %s192, 8
        %s194 = scalar_lea.vmem %s1, %s193
        %s195 = smul.u32 6, %s19
      $region24: #{_lambda_.1} parent=19 // pred_fallthru
        _
      // Predicated region
      $region25: #{_lambda_.1} parent=19 // pred_check
        %p196 = pneg %p115
      $region26: #{_lambda_.1} parent=19 // pred_check_branch
        %198 = sbr.rel (%p196) target = $region28
      $region27: #{_lambda_.1} parent=19 // pred_region
        %p199 = scmp.lt.s32.totalorder %s18, 15
        %s200 = scalar_select %p199, %s18, 15
        %p201 = scmp.lt.s32.totalorder %s17, 0
        %s202 = scalar_select %p201, %s17, 0
        %s203 = sadd.s32 %s202, %s200
        %s204 = scalar_lea.vmem %s2, %s203
      $region28: #{_lambda_.1} parent=19 // pred_fallthru
        _
    $region20: #{_lambda_.1} parent=5 // pred_fallthru
      _
    %p205 = scmp.le.s32.totalorder 1, %s9
    %p206 = scmp.lt.s32.totalorder %s9, 17
    %p207 = pnand %p205, %p206
    %p208 = pneg %p207
    // Predicated region
    $region29: #{_lambda_.1} parent=5 // pred_check
      _
    $region30: #{_lambda_.1} parent=5 // pred_check_branch
      %210 = sbr.rel (%p207) target = $region32
    $region31: #{_lambda_.1} parent=5 // pred_region
      %s211 = ssub.s32 %s9, 1
      %s212 = smul.u32 3, %s20
      %p213 = scmp.lt.s32.totalorder %s212, 2
      %s214 = scalar_select %p213, %s212, 2
      %p215 = scmp.lt.s32.totalorder %s23, 0
      %s216 = scalar_select %p215, %s23, 0
      %s217 = sadd.s32 %s216, %s214
      %s218 = smul.addr %s217, 8
      %s219 = scalar_lea.vmem %s0, %s218
      %p220 = pneg %p63
      %p221 = pneg %p60
      %s222 = smul.u32 6, %s23
      %p223 = scmp.lt.s32.totalorder %s22, 15
      %s224 = scalar_select %p223, %s22, 15
      %p225 = scmp.lt.s32.totalorder %s222, 5
      %s226 = scalar_select %p225, %s222, 5
      %p227 = scmp.lt.s32.totalorder %s21, 0
      %s228 = scalar_select %p227, %s21, 0
      %s229 = sadd.s32 %s228, %s226
      %s230 = smul.addr %s224, 6
      %s231 = sadd.s32 %s229, %s230
      %s232 = smul.addr %s231, 8
      %s233 = scalar_lea.vmem %s1, %s232
      %p234 = pneg %p93
      %p235 = pneg %p90
      %p236 = scmp.lt.s32.totalorder %s22, 15
      %s237 = scalar_select %p236, %s22, 15
      %p238 = scmp.lt.s32.totalorder %s21, 0
      %s239 = scalar_select %p238, %s21, 0
      %s240 = sadd.s32 %s239, %s237
      %s241 = scalar_lea.vmem %s2, %s240
      %p242 = pneg %p121
      %p243 = pneg %p118
      %p244 = pneg %p149
      %p245 = pneg %p146
      %s246 = smul.u32 3, %s20
      %p247 = scmp.lt.s32.totalorder %s246, 2
      %s248 = scalar_select %p247, %s246, 2
      %p249 = scmp.lt.s32.totalorder %s21, 0
      %s250 = scalar_select %p249, %s21, 0
      %s251 = sadd.s32 %s250, %s248
      %s252 = smul.addr %s251, 8
      %s253 = scalar_lea.vmem %s3, %s252
      %s254 = smul.u32 3, %s20
      %p255 = scmp.lt.s32.totalorder %s254, 2
      %s256 = scalar_select %p255, %s254, 2
      %p257 = scmp.lt.s32.totalorder %s23, 0
      %s258 = scalar_select %p257, %s23, 0
      %s259 = sadd.s32 %s258, %s256
      %s260 = smul.addr %s259, 8
      %s261 = scalar_lea.vmem %s0, %s260
      %s262 = smul.u32 3, %s20
      %s263 = smul.u32 6, %s23
      %p264 = scmp.lt.s32.totalorder %s22, 15
      %s265 = scalar_select %p264, %s22, 15
      %p266 = scmp.lt.s32.totalorder %s263, 5
      %s267 = scalar_select %p266, %s263, 5
      %p268 = scmp.lt.s32.totalorder %s21, 0
      %s269 = scalar_select %p268, %s21, 0
      %s270 = sadd.s32 %s269, %s267
      %s271 = smul.addr %s265, 6
      %s272 = sadd.s32 %s270, %s271
      %s273 = smul.addr %s272, 8
      %s274 = scalar_lea.vmem %s1, %s273
      %s275 = smul.u32 6, %s23
      %p276 = scmp.lt.s32.totalorder %s22, 15
      %s277 = scalar_select %p276, %s22, 15
      %p278 = scmp.lt.s32.totalorder %s21, 0
      %s279 = scalar_select %p278, %s21, 0
      %s280 = sadd.s32 %s279, %s277
      %s281 = scalar_lea.vmem %s2, %s280
      %s282 = smul.u32 3, %s20
      %p283 = scmp.lt.s32.totalorder %s282, 2
      %s284 = scalar_select %p283, %s282, 2
      %p285 = scmp.lt.s32.totalorder %s21, 0
      %s286 = scalar_select %p285, %s21, 0
      %s287 = sadd.s32 %s286, %s284
      %s288 = smul.addr %s287, 8
      %s289 = scalar_lea.vmem %s3, %s288
      %s290 = smul.u32 3, %s20
      %p291 = scmp.eq.s32.totalorder %s22, 0
      %p292 = scmp.eq.s32.totalorder %s23, 0
      %p293 = pnand %p291, %p292
      %p294 = pneg %p293
      // Predicated region
      $region33: #{_lambda_.1} parent=31 // pred_check
        _
      $region34: #{_lambda_.1} parent=31 // pred_check_branch
        %296 = sbr.rel (%p293) target = $region36
      $region35: #{_lambda_.1} parent=31 // pred_region
        %vm297 = vcmask 130048
        %298 = vst.msk [vmem:[#allocation3] sm:$0xff] %vm297, -inf
        %299 = vst.msk [vmem:[#allocation3 + $0x8] sm:$0xff] %vm297, -inf
        %vm300 = vcmask 125952
        %301 = vst.msk [vmem:[#allocation3 + $0x10] sm:$0xf] %vm300, -inf
      $region36: #{_lambda_.1} parent=31 // pred_fallthru
        _
      // Predicated region
      $region37: #{_lambda_.1} parent=31 // pred_check
        %p302 = pneg %p292
      $region38: #{_lambda_.1} parent=31 // pred_check_branch
        %304 = sbr.rel (%p302) target = $region40
      $region39: #{_lambda_.1} parent=31 // pred_region
        %vm305 = vcmask 130048
        %306 = vst.msk [vmem:[#allocation2] sm:$0xff] %vm305, 0.0
        %307 = vst.msk [vmem:[#allocation2 + $0x8] sm:$0xff] %vm305, 0.0
        %vm308 = vcmask 125952
        %309 = vst.msk [vmem:[#allocation2 + $0x10] sm:$0xf] %vm308, 0.0
      $region40: #{_lambda_.1} parent=31 // pred_fallthru
        _
      %v310 = vld [vmem:[#allocation2] sm:$0xff]
      %v311 = vld [vmem:[#allocation2 + $0x8] sm:$0xff]
      %v312 = vld [vmem:[#allocation2 + $0x10] sm:$0xf]
      %v313 = vld [vmem:[%s261] sm:$0xff]
      %v314 = vld [vmem:[%s261 + $0x8] sm:$0xff]
      %v315 = vld [vmem:[%s261 + $0x10] sm:$0xf]
      %v316 = vld [vmem:[%s274] sm:$0xff]
      %v317 = vld [vmem:[%s274 + $0x8] sm:$0xff]
      %v318 = vld [vmem:[%s274 + $0x10] sm:$0xff]
      %v319 = vld [vmem:[%s274 + $0x18] sm:$0xff]
      %v320 = vld [vmem:[%s274 + $0x20] sm:$0xff]
      %v321 = vld [vmem:[%s274 + $0x28] sm:$0xff]
      %vm322 = vcmask 392192
      %v324 = vsel %vm322, %v313, 0
      %v327 = vsel %vm322, %v314, 0
      %v330 = vsel %vm322, %v315, 0
      %332 = vmatprep.subr.mxu0 0.0
      %333 = vmatpush1.msra.mxu0 %v316
      %334 = vmatprep.subr.mxu0 0.0
      %335 = vmatpush1.msra.mxu0 %v317
      %336 = vmatprep.subr.mxu0 0.0
      %337 = vmatpush1.msra.mxu0 %v318
      %338 = vmatprep.subr.mxu0 0.0
      %339 = vmatpush1.msra.mxu0 %v319
      %340 = vmatprep.subr.mxu0 0.0
      %341 = vmatpush1.msra.mxu0 %v320
      %342 = vmatprep.subr.mxu0 0.0
      %343 = vmatpush1.msra.mxu0 %v321
      %344 = vmatprep.subr.mxu0 0.0
      %345 = vmatpush1.msra.mxu0 0.0
      %346 = vmatprep.subr.mxu0 0.0
      %347 = vmatpush1.msra.mxu0 0.0
      %348 = vmatprep.subr.mxu0 0.0
      %349 = vmatpush1.msra.mxu0 0.0
      %350 = vmatprep.subr.mxu0 0.0
      %351 = vmatpush1.msra.mxu0 0.0
      %352 = vmatprep.subr.mxu0 0.0
      %353 = vmatpush1.msra.mxu0 0.0
      %354 = vmatprep.subr.mxu0 0.0
      %355 = vmatpush1.msra.mxu0 0.0
      %356 = vmatprep.subr.mxu0 0.0
      %357 = vmatpush1.msra.mxu0 0.0
      %358 = vmatprep.subr.mxu0 0.0
      %359 = vmatpush1.msra.mxu0 0.0
      %360 = vmatprep.subr.mxu0 0.0
      %361 = vmatpush1.msra.mxu0 0.0
      %362 = vmatprep.subr.mxu0 0.0
      %363 = vmatpush1.msra.mxu0 0.0
      %364 = vmatprep.subr.mxu0 0.0
      %365 = vmatpush1.msra.mxu0 0.0
      %366 = vmatprep.subr.mxu0 0.0
      %367 = vmatpush1.msra.mxu0 0.0
      %368 = vmatprep.subr.mxu0 0.0
      %369 = vmatpush1.msra.mxu0 0.0
      %370 = vmatprep.subr.mxu0 0.0
      %371 = vmatpush1.msra.mxu0 0.0
      %372 = vmatprep.subr.mxu0 0.0
      %373 = vmatpush1.msra.mxu0 0.0
      %374 = vmatprep.subr.mxu0 0.0
      %375 = vmatpush1.msra.mxu0 0.0
      %376 = vmatprep.subr.mxu0 0.0
      %377 = vmatpush1.msra.mxu0 0.0
      %378 = vmatprep.subr.mxu0 0.0
      %379 = vmatpush1.msra.mxu0 0.0
      %380 = vmatprep.subr.mxu0 0.0
      %381 = vmatpush1.msra.mxu0 0.0
      %382 = vmatprep.subr.mxu0 0.0
      %383 = vmatpush1.msra.mxu0 0.0
      %384 = vmatprep.subr.mxu0 0.0
      %385 = vmatpush1.msra.mxu0 0.0
      %386 = vmatprep.subr.mxu0 0.0
      %387 = vmatpush1.msra.mxu0 0.0
      %388 = vmatprep.subr.mxu0 0.0
      %389 = vmatpush1.msra.mxu0 0.0
      %390 = vmatprep.subr.mxu0 0.0
      %391 = vmatpush1.msra.mxu0 0.0
      %392 = vmatprep.subr.mxu0 0.0
      %393 = vmatpush1.msra.mxu0 0.0
      %394 = vmatprep.subr.mxu0 0.0
      %395 = vmatpush1.msra.mxu0 0.0
      %396 = vmatprep.mubr.f32.mxu0 0.0
      %397 = vmatmul.mubr.f32.gmra.mrb[0].mxu0 %v324
      %v398 = vpop.f32.mrb[0].mxu0
      %v399 = vadd.f32 0.0, %v398
      %v400 = vpop.f32.mrb[0].mxu0
      %401 = vmatprep.mubr.f32.mxu0 0.0
      %402 = vmatmul.mubr.f32.gmra.mrb[0].mxu0 %v327
      %v403 = vpop.f32.mrb[0].mxu0
      %v404 = vadd.f32 0.0, %v403
      %v405 = vpop.f32.mrb[0].mxu0
      %406 = vmatprep.mubr.f32.mxu0 0.0
      %407 = vmatmul.mubr.f32.gmra.mrb[0].mxu0 %v330
      %v408 = vpop.f32.mrb[0].mxu0
      %v409 = vadd.f32 0.0, %v408
      %v410 = vpop.f32.mrb[0].mxu0
      %411 = vdwg.mxu0
      %v412 = vadd.f32 %v310, %v399
      %v413 = vadd.f32 %v311, %v404
      %v414 = vadd.f32 %v312, %v409
      %vm415 = vcmask 130048
      %416 = vst.msk [vmem:[#allocation2] sm:$0xff] %vm415, %v412
      %417 = vst.msk [vmem:[#allocation2 + $0x8] sm:$0xff] %vm415, %v413
      %vm418 = vcmask 125952
      %419 = vst.msk [vmem:[#allocation2 + $0x10] sm:$0xf] %vm418, %v414
      // Predicated region
      $region41: #{_lambda_.1} parent=31 // pred_check
        %p420 = pneg %p292
      $region42: #{_lambda_.1} parent=31 // pred_check_branch
        %422 = sbr.rel (%p420) target = $region44
      $region43: #{_lambda_.1} parent=31 // pred_region
        %v423 = vld [vmem:[#allocation3] sm:$0xff]
        %v424 = vld [vmem:[#allocation3 + $0x8] sm:$0xff]
        %v425 = vld [vmem:[#allocation3 + $0x10] sm:$0xf]
        %v426 = vld [vmem:[#allocation2] sm:$0xff]
        %v427 = vld [vmem:[#allocation2 + $0x8] sm:$0xff]
        %v428 = vld [vmem:[#allocation2 + $0x10] sm:$0xf]
        %v429 = vld [vmem:[%s281] sm:$0x1]
        %v431 = vlaneseq
        %v432 = vshrl.u32 %v431, 7
        %v433 = vsub.s32 0, %v432
        %v434 = vrot.slane %v429, %v433
        %v436 = vadd.f32 %v426, %v434
        %v437 = vadd.f32 %v427, %v434
        %v438 = vadd.f32 %v428, %v434
        %v439 = vmax.f32 %v423, %v436
        %v440 = vmax.f32 %v424, %v437
        %v441 = vmax.f32 %v425, %v438
        %442 = vst.msk [vmem:[#allocation3] sm:$0xff] %vm415, %v439
        %443 = vst.msk [vmem:[#allocation3 + $0x8] sm:$0xff] %vm415, %v440
        %444 = vst.msk [vmem:[#allocation3 + $0x10] sm:$0xf] %vm418, %v441
      $region44: #{_lambda_.1} parent=31 // pred_fallthru
        _
      %p445 = scmp.eq.s32.totalorder %s22, 15
      %p446 = pnand %p445, %p292
      %p447 = pneg %p446
      // Predicated region
      $region45: #{_lambda_.1} parent=31 // pred_check
        _
      $region46: #{_lambda_.1} parent=31 // pred_check_branch
        %449 = sbr.rel (%p446) target = $region48
      $region47: #{_lambda_.1} parent=31 // pred_region
        %v450 = vld [vmem:[#allocation3] sm:$0xff]
        %v451 = vld [vmem:[#allocation3 + $0x8] sm:$0xff]
        %v452 = vld [vmem:[#allocation3 + $0x10] sm:$0xf]
        %453 = vst.msk [vmem:[%s289] sm:$0xff] %vm415, %v450
        %454 = vst.msk [vmem:[%s289 + $0x8] sm:$0xff] %vm415, %v451
        %455 = vst.msk [vmem:[%s289 + $0x10] sm:$0xf] %vm418, %v452
      $region48: #{_lambda_.1} parent=31 // pred_fallthru
        _
      %s456 = smul.u32 3, %s20
      %p457 = scmp.lt.s32.totalorder %s456, 2
      %s458 = scalar_select %p457, %s456, 2
      %p459 = scmp.lt.s32.totalorder %s21, 0
      %s460 = scalar_select %p459, %s21, 0
      %s461 = sadd.s32 %s460, %s458
      %s462 = smul.addr %s461, 8
      %s463 = scalar_lea.vmem %s3, %s462
      // Predicated region
      $region49: #{_lambda_.1} parent=31 // pred_check
        %p464 = pneg %p146
      $region50: #{_lambda_.1} parent=31 // pred_check_branch
        %466 = sbr.rel (%p464) target = $region52
      $region51: #{_lambda_.1} parent=31 // pred_region
        %s467 = smul.u32 3, %s20
      $region52: #{_lambda_.1} parent=31 // pred_fallthru
        _
      // Predicated region
      $region53: #{_lambda_.1} parent=31 // pred_check
        %p468 = pneg %p146
      $region54: #{_lambda_.1} parent=31 // pred_check_branch
        %470 = sbr.rel (%p468) target = $region56
      $region55: #{_lambda_.1} parent=31 // pred_region
        %s471 = smul.u32 3, %s20
        %p472 = scmp.lt.s32.totalorder %s471, 2
        %s473 = scalar_select %p472, %s471, 2
        %p474 = scmp.lt.s32.totalorder %s21, 0
        %s475 = scalar_select %p474, %s21, 0
        %s476 = sadd.s32 %s475, %s473
        %s477 = smul.addr %s476, 8
        %s478 = scalar_lea.vmem %s3, %s477
      $region56: #{_lambda_.1} parent=31 // pred_fallthru
        _
    $region32: #{_lambda_.1} parent=5 // pred_fallthru
      _
    %p479 = scmp.le.s32.totalorder 2, %s9
    // Predicated region
    $region57: #{_lambda_.1} parent=5 // pred_check
      %p480 = pneg %p479
    $region58: #{_lambda_.1} parent=5 // pred_check_branch
      %482 = sbr.rel (%p480) target = $region60
    $region59: #{_lambda_.1} parent=5 // pred_region
      %s483 = ssub.s32 %s9, 2
    $region60: #{_lambda_.1} parent=5 // pred_fallthru
      _
  $region6: #{_lambda_.1} parent=0 // loop_footer
    %s13 = sadd.s32 1, %s9
  $region7: #{_lambda_.1} parent=0 // loop_footer_branch
    %8 = sbr.rel target = $region3
  $region8: #{_lambda_.1} parent=0 // loop_exit
    _

</llo_original>
